<compile_context>
chip_gen: v6e
topology: v6e:2x2x1
jax: 0.10.0
libtpu: 0.0.40
codegen_flags: <defaults>
</compile_context>

<pallas_src>
import jax
import jax.numpy as jnp
from jax import lax
from jax.experimental import pallas as pl
from jax.experimental.pallas import tpu as pltpu

# LIF neuron constants (deterministic, fixed in-script)
TAU = 2.0          # membrane time constant
INV_TAU = 1.0 / TAU
U_TH = 0.5         # firing threshold
U_REST = 0.0       # resting potential


def _sequential_kernel(x_ref, w1_ref, b1_ref, w2_ref, b2_ref, o_ref,
                       u_ref, hs_ref):
    """One time-chunk of the Linear -> LIF -> Linear pipeline.

    x_ref  : (t_tile*Bp, F_in_p)  time-flattened input chunk
    o_ref  : (t_tile*Bp, F_out_p) time-flattened output chunk
    u_ref  : (Bp, H_p)            membrane potential (persists across chunks)
    hs_ref : (t_tile*Bp, H_p)     holds h_all, overwritten in place by spikes
    """
    tc = pl.program_id(0)  # time-chunk index (serial / "arbitrary")

    # Temporal-container state init at the first chunk of the sequence.
    @pl.when(tc == 0)
    def _():
        u_ref[...] = jnp.zeros_like(u_ref)

    bp, _ = u_ref.shape
    t_tile = x_ref.shape[0] // bp

    # Linear 1 (multi-time-step Linear on the flattened chunk): ONE MXU call.
    # Fold 1/TAU into the whole chunk once so the serial LIF step is a single
    # fused multiply-add instead of three VALU ops.
    h_all = jnp.dot(x_ref[...], w1_ref[...], preferred_element_type=jnp.float32)
    hs_ref[...] = (h_all + b1_ref[...]) * INV_TAU

    # LIF soma (Temporal container): serial over time.  Membrane `u` is the
    # fori_loop carry (lives in vregs); spikes are written in place over the
    # already-consumed h slice of the VMEM scratch (no concatenate).
    decay = jnp.float32(1.0 - INV_TAU)

    def lif_step(t, u):
        r = pl.multiple_of(t * bp, 8)               # aligned sublane slice
        h_t = hs_ref[pl.ds(r, bp), :]               # (Bp, H_p)
        u = decay * u + h_t                         # u = (1-1/tau)*u + h/tau
        fired = u >= U_TH
        hs_ref[pl.ds(r, bp), :] = fired.astype(jnp.float32)
        return jnp.where(fired, jnp.float32(U_REST), u)   # hard reset

    u_ref[...] = lax.fori_loop(0, t_tile, lif_step, u_ref[...],
                               unroll=min(8, t_tile))

    # Linear 2 over the whole chunk of spikes: ONE MXU call, lane-dense slab
    # store of the output block.  Spikes (0/1) are exact in bf16 if used.
    y = jnp.dot(hs_ref[...].astype(w2_ref.dtype), w2_ref[...],
                preferred_element_type=jnp.float32) + b2_ref[...]
    o_ref[...] = y.astype(o_ref.dtype)


def _round_up(n, m):
    return ((n + m - 1) // m) * m


def sequential_forward(x, w1, b1, w2, b2, *, t_tile=None,
                       matmul_dtype=jnp.float32):
    """x: [T, B, F_in] -> y: [T, B, F_out]."""
    T, B, F_in = x.shape
    H = w1.shape[1]
    F_out = w2.shape[1]

    # Sublane-align batch (8 rows for f32) and lane-align all feature dims
    # (128) so LIF slices are full vregs and all stores are lane-dense.
    # Zero padding is semantics-preserving (padded rows/cols are dropped).
    Bp = _round_up(B, 8)
    Fip = _round_up(F_in, 128)
    Hp = _round_up(H, 128)
    Fop = _round_up(F_out, 128)

    xp = jnp.zeros((T, Bp, Fip), jnp.float32).at[:, :B, :F_in].set(x)
    w1p = jnp.zeros((Fip, Hp), jnp.float32).at[:F_in, :H].set(w1)
    b1p = jnp.zeros((1, Hp), jnp.float32).at[:, :H].set(b1)
    w2p = jnp.zeros((Hp, Fop), jnp.float32).at[:H, :F_out].set(w2)
    b2p = jnp.zeros((1, Fop), jnp.float32).at[:, :F_out].set(b2)

    # Optional bf16 matmul operands (f32 accumulate).  Membrane/threshold math
    # stays f32 inside the kernel regardless.
    xp = xp.astype(matmul_dtype)
    w1p = w1p.astype(matmul_dtype)
    w2p = w2p.astype(matmul_dtype)

    if t_tile is None:
        # Target chunk slabs of <= ~512 rows while keeping >= 2 chunks so the
        # BlockSpec pipeline can double-buffer x/out DMAs against compute.
        target = max(1, 512 // Bp)
        t_tile = next((c for c in range(min(T, target), 0, -1) if T % c == 0), T)
        if t_tile == T and T % 2 == 0:
            t_tile = T // 2
    assert T % t_tile == 0, "t_tile must divide T"
    num_chunks = T // t_tile
    rows = t_tile * Bp

    # Wrapper-side layout plumbing (free reshape): present 2-D lane-major
    # slabs to the kernel.
    x2d = xp.reshape(T * Bp, Fip)

    y2d = pl.pallas_call(
        _sequential_kernel,
        out_shape=jax.ShapeDtypeStruct((T * Bp, Fop), jnp.float32),
        grid_spec=pltpu.PrefetchScalarGridSpec(
            num_scalar_prefetch=0,
            grid=(num_chunks,),
            in_specs=[
                pl.BlockSpec((rows, Fip), lambda tc: (tc, 0)),   # x chunk
                pl.BlockSpec((Fip, Hp), lambda tc: (0, 0)),      # W1 (resident)
                pl.BlockSpec((1, Hp), lambda tc: (0, 0)),        # b1
                pl.BlockSpec((Hp, Fop), lambda tc: (0, 0)),      # W2 (resident)
                pl.BlockSpec((1, Fop), lambda tc: (0, 0)),       # b2
            ],
            out_specs=pl.BlockSpec((rows, Fop), lambda tc: (tc, 0)),
            scratch_shapes=[
                pltpu.VMEM((Bp, Hp), jnp.float32),      # membrane potential u
                pltpu.VMEM((rows, Hp), jnp.float32),    # h_all / spikes scratch
            ],
        ),
        compiler_params=pltpu.CompilerParams(
            # Time chunks carry the membrane state -> must stay serial.
            # (At realistic sizes also raise vmem_limit_bytes on v6e to fit
            # larger double-buffered chunks; keep default for these shapes.)
            dimension_semantics=("arbitrary",),
        ),
    )(x2d, w1p, b1p, w2p, b2p)

    return y2d.reshape(T, Bp, Fop)[:, :B, :F_out]


def sequential_reference(x, w1, b1, w2, b2):
    """Pure-JAX reference of the same Sequential forward."""
    T, B, _ = x.shape
    H = w1.shape[1]
    u = jnp.zeros((B, H), jnp.float32)
    decay = 1.0 - 1.0 / TAU
    outs = []
    for t in range(T):
        h = x[t] @ w1 + b1
        u = decay * u + (1.0 / TAU) * h          # LIF charge (U_REST == 0)
        spike = u >= U_TH
        u = jnp.where(spike, U_REST, u)          # hard reset
        outs.append(spike.astype(jnp.float32) @ w2 + b2)
    return jnp.stack(outs)


if __name__ == "__main__":
    key = jax.random.PRNGKey(0)
    k_x, k_w1, k_b1, k_w2, k_b2 = jax.random.split(key, 5)

    T, B, F_in, H, F_out = 8, 2, 16, 32, 16

    x = jax.random.normal(k_x, (T, B, F_in), dtype=jnp.float32)
    w1 = jax.random.normal(k_w1, (F_in, H), dtype=jnp.float32) * 0.3
    b1 = jax.random.normal(k_b1, (1, H), dtype=jnp.float32) * 0.1
    w2 = jax.random.normal(k_w2, (H, F_out), dtype=jnp.float32) * 0.3
    b2 = jax.random.normal(k_b2, (1, F_out), dtype=jnp.float32) * 0.1

    y = sequential_forward(x, w1, b1, w2, b2)
    jax.block_until_ready(y)

    y_ref = sequential_reference(x, w1, b1, w2, b2)
    assert y.shape == (T, B, F_out)
    assert jnp.allclose(y, y_ref, rtol=1e-4, atol=1e-4), "mismatch vs reference"

    print("KERNEL_OK")
</pallas_src>

<mosaic_0001>
module attributes {stable_mosaic.version = 11 : i64} {
  func.func @_sequential_kernel(%arg0: i32, %arg1: memref<32x128xf32, #tpu.memory_space<vmem>>, %arg2: memref<128x128xf32, #tpu.memory_space<vmem>>, %arg3: memref<1x128xf32, #tpu.memory_space<vmem>>, %arg4: memref<128x128xf32, #tpu.memory_space<vmem>>, %arg5: memref<1x128xf32, #tpu.memory_space<vmem>>, %arg6: memref<32x128xf32, #tpu.memory_space<vmem>>, %arg7: memref<8x128xf32, #tpu.memory_space<vmem>>, %arg8: memref<32x128xf32, #tpu.memory_space<vmem>>) attributes {dimension_semantics = [#tpu.dimension_semantics<arbitrary>], iteration_bounds = array<i64: 2>, scalar_prefetch = 0 : i64, scratch_operands = 2 : i64, tpu.core_type = #tpu.core_type<tc>, window_params = [{transform_indices = @transform_0, window_bounds = array<i64: 32, 128>}, {pipeline_mode = #tpu.pipeline_mode<synchronous>, transform_indices = @transform_1, window_bounds = array<i64: 128, 128>}, {pipeline_mode = #tpu.pipeline_mode<synchronous>, transform_indices = @transform_2, window_bounds = array<i64: 1, 128>}, {pipeline_mode = #tpu.pipeline_mode<synchronous>, transform_indices = @transform_3, window_bounds = array<i64: 128, 128>}, {pipeline_mode = #tpu.pipeline_mode<synchronous>, transform_indices = @transform_4, window_bounds = array<i64: 1, 128>}, {transform_indices = @transform_5, window_bounds = array<i64: 32, 128>}]} {
    %c0_i32 = arith.constant 0 : i32
    %0 = arith.cmpi eq, %arg0, %c0_i32 : i32
    %1 = arith.extui %0 : i1 to i32
    %c0_i32_0 = arith.constant 0 : i32
    %2 = arith.cmpi ne, %1, %c0_i32_0 : i32
    scf.if %2 {
      %cst_43 = arith.constant 0.000000e+00 : f32
      %81 = vector.broadcast %cst_43 : f32 to vector<8x128xf32>
      %c0_44 = arith.constant 0 : index
      %c0_45 = arith.constant 0 : index
      %82 = vector.load %arg7[%c0_44, %c0_45] : memref<8x128xf32, #tpu.memory_space<vmem>>, vector<8x128xf32>
      tpu.vector_store %arg7[%c0_44, %c0_45], %81 {strides = array<i32>} : memref<8x128xf32, #tpu.memory_space<vmem>>, vector<8x128xf32>,
    } else {
    }
    %c0 = arith.constant 0 : index
    %c0_1 = arith.constant 0 : index
    %3 = vector.load %arg1[%c0, %c0_1] : memref<32x128xf32, #tpu.memory_space<vmem>>, vector<32x128xf32>
    %c0_2 = arith.constant 0 : index
    %c0_3 = arith.constant 0 : index
    %4 = vector.load %arg2[%c0_2, %c0_3] : memref<128x128xf32, #tpu.memory_space<vmem>>, vector<128x128xf32>
    %cst = arith.constant dense<0.000000e+00> : vector<32x128xf32>
    %5 = tpu.matmul %3, %4, %cst {dimension_numbers = #tpu.dot_dimension_numbers<[1], [0], [0], [1], [0, 0, 1, 1], [], []>} : vector<32x128xf32>, vector<128x128xf32>, vector<32x128xf32> -> vector<32x128xf32>
    %c0_4 = arith.constant 0 : index
    %c0_5 = arith.constant 0 : index
    %6 = vector.load %arg3[%c0_4, %c0_5] : memref<1x128xf32, #tpu.memory_space<vmem>>, vector<1x128xf32>
    %7 = vector.broadcast %6 : vector<1x128xf32> to vector<32x128xf32>
    %8 = arith.addf %5, %7 : vector<32x128xf32>
    %cst_6 = arith.constant 5.000000e-01 : f32
    %9 = vector.broadcast %cst_6 : f32 to vector<32x128xf32>
    %10 = arith.mulf %8, %9 : vector<32x128xf32>
    %c0_7 = arith.constant 0 : index
    %c0_8 = arith.constant 0 : index
    %11 = vector.load %arg8[%c0_7, %c0_8] : memref<32x128xf32, #tpu.memory_space<vmem>>, vector<32x128xf32>
    tpu.vector_store %arg8[%c0_7, %c0_8], %10 {strides = array<i32>} : memref<32x128xf32, #tpu.memory_space<vmem>>, vector<32x128xf32>,
    %c0_9 = arith.constant 0 : index
    %c0_10 = arith.constant 0 : index
    %12 = vector.load %arg7[%c0_9, %c0_10] : memref<8x128xf32, #tpu.memory_space<vmem>>, vector<8x128xf32>
    %cst_11 = arith.constant 5.000000e-01 : f32
    %c0_i32_12 = arith.constant 0 : i32
    %c8_i32 = arith.constant 8 : i32
    %13 = arith.muli %c0_i32_12, %c8_i32 : i32
    %14 = tpu.assume_multiple %13, 8 : i32
    %15 = arith.index_cast %14 : i32 to index
    %c0_13 = arith.constant 0 : index
    %16 = vector.load %arg8[%15, %c0_13] : memref<32x128xf32, #tpu.memory_space<vmem>>, vector<8x128xf32>
    %17 = vector.broadcast %cst_11 : f32 to vector<8x128xf32>
    %18 = arith.mulf %17, %12 : vector<8x128xf32>
    %19 = arith.addf %18, %16 : vector<8x128xf32>
    %cst_14 = arith.constant 5.000000e-01 : f32
    %20 = vector.broadcast %cst_14 : f32 to vector<8x128xf32>
    %21 = arith.cmpf oge, %19, %20 : vector<8x128xf32>
    %22 = arith.extui %21 : vector<8x128xi1> to vector<8x128xi32>
    %23 = arith.sitofp %22 : vector<8x128xi32> to vector<8x128xf32>
    %24 = arith.index_cast %14 : i32 to index
    %c0_15 = arith.constant 0 : index
    %25 = vector.load %arg8[%24, %c0_15] : memref<32x128xf32, #tpu.memory_space<vmem>>, vector<8x128xf32>
    tpu.vector_store %arg8[%24, %c0_15], %23 {strides = array<i32>} : memref<32x128xf32, #tpu.memory_space<vmem>>, vector<8x128xf32>,
    %cst_16 = arith.constant 0.000000e+00 : f32
    %26 = vector.broadcast %cst_16 : f32 to vector<8x128xf32>
    %27 = arith.select %21, %26, %19 : vector<8x128xi1>, vector<8x128xf32>
    %c1_i32 = arith.constant 1 : i32
    %c8_i32_17 = arith.constant 8 : i32
    %28 = arith.muli %c1_i32, %c8_i32_17 : i32
    %29 = tpu.assume_multiple %28, 8 : i32
    %30 = arith.index_cast %29 : i32 to index
    %c0_18 = arith.constant 0 : index
    %31 = vector.load %arg8[%30, %c0_18] : memref<32x128xf32, #tpu.memory_space<vmem>>, vector<8x128xf32>
    %32 = vector.broadcast %cst_11 : f32 to vector<8x128xf32>
    %33 = arith.mulf %32, %27 : vector<8x128xf32>
    %34 = arith.addf %33, %31 : vector<8x128xf32>
    %cst_19 = arith.constant 5.000000e-01 : f32
    %35 = vector.broadcast %cst_19 : f32 to vector<8x128xf32>
    %36 = arith.cmpf oge, %34, %35 : vector<8x128xf32>
    %37 = arith.extui %36 : vector<8x128xi1> to vector<8x128xi32>
    %38 = arith.sitofp %37 : vector<8x128xi32> to vector<8x128xf32>
    %39 = arith.index_cast %29 : i32 to index
    %c0_20 = arith.constant 0 : index
    %40 = vector.load %arg8[%39, %c0_20] : memref<32x128xf32, #tpu.memory_space<vmem>>, vector<8x128xf32>
    tpu.vector_store %arg8[%39, %c0_20], %38 {strides = array<i32>} : memref<32x128xf32, #tpu.memory_space<vmem>>, vector<8x128xf32>,
    %cst_21 = arith.constant 0.000000e+00 : f32
    %41 = vector.broadcast %cst_21 : f32 to vector<8x128xf32>
    %42 = arith.select %36, %41, %34 : vector<8x128xi1>, vector<8x128xf32>
    %c2_i32 = arith.constant 2 : i32
    %c8_i32_22 = arith.constant 8 : i32
    %43 = arith.muli %c2_i32, %c8_i32_22 : i32
    %44 = tpu.assume_multiple %43, 8 : i32
    %45 = arith.index_cast %44 : i32 to index
    %c0_23 = arith.constant 0 : index
    %46 = vector.load %arg8[%45, %c0_23] : memref<32x128xf32, #tpu.memory_space<vmem>>, vector<8x128xf32>
    %47 = vector.broadcast %cst_11 : f32 to vector<8x128xf32>
    %48 = arith.mulf %47, %42 : vector<8x128xf32>
    %49 = arith.addf %48, %46 : vector<8x128xf32>
    %cst_24 = arith.constant 5.000000e-01 : f32
    %50 = vector.broadcast %cst_24 : f32 to vector<8x128xf32>
    %51 = arith.cmpf oge, %49, %50 : vector<8x128xf32>
    %52 = arith.extui %51 : vector<8x128xi1> to vector<8x128xi32>
    %53 = arith.sitofp %52 : vector<8x128xi32> to vector<8x128xf32>
    %54 = arith.index_cast %44 : i32 to index
    %c0_25 = arith.constant 0 : index
    %55 = vector.load %arg8[%54, %c0_25] : memref<32x128xf32, #tpu.memory_space<vmem>>, vector<8x128xf32>
    tpu.vector_store %arg8[%54, %c0_25], %53 {strides = array<i32>} : memref<32x128xf32, #tpu.memory_space<vmem>>, vector<8x128xf32>,
    %cst_26 = arith.constant 0.000000e+00 : f32
    %56 = vector.broadcast %cst_26 : f32 to vector<8x128xf32>
    %57 = arith.select %51, %56, %49 : vector<8x128xi1>, vector<8x128xf32>
    %c3_i32 = arith.constant 3 : i32
    %c8_i32_27 = arith.constant 8 : i32
    %58 = arith.muli %c3_i32, %c8_i32_27 : i32
    %59 = tpu.assume_multiple %58, 8 : i32
    %60 = arith.index_cast %59 : i32 to index
    %c0_28 = arith.constant 0 : index
    %61 = vector.load %arg8[%60, %c0_28] : memref<32x128xf32, #tpu.memory_space<vmem>>, vector<8x128xf32>
    %62 = vector.broadcast %cst_11 : f32 to vector<8x128xf32>
    %63 = arith.mulf %62, %57 : vector<8x128xf32>
    %64 = arith.addf %63, %61 : vector<8x128xf32>
    %cst_29 = arith.constant 5.000000e-01 : f32
    %65 = vector.broadcast %cst_29 : f32 to vector<8x128xf32>
    %66 = arith.cmpf oge, %64, %65 : vector<8x128xf32>
    %67 = arith.extui %66 : vector<8x128xi1> to vector<8x128xi32>
    %68 = arith.sitofp %67 : vector<8x128xi32> to vector<8x128xf32>
    %69 = arith.index_cast %59 : i32 to index
    %c0_30 = arith.constant 0 : index
    %70 = vector.load %arg8[%69, %c0_30] : memref<32x128xf32, #tpu.memory_space<vmem>>, vector<8x128xf32>
    tpu.vector_store %arg8[%69, %c0_30], %68 {strides = array<i32>} : memref<32x128xf32, #tpu.memory_space<vmem>>, vector<8x128xf32>,
    %cst_31 = arith.constant 0.000000e+00 : f32
    %71 = vector.broadcast %cst_31 : f32 to vector<8x128xf32>
    %72 = arith.select %66, %71, %64 : vector<8x128xi1>, vector<8x128xf32>
    %c4_i32 = arith.constant 4 : i32
    %c0_32 = arith.constant 0 : index
    %c0_33 = arith.constant 0 : index
    %73 = vector.load %arg7[%c0_32, %c0_33] : memref<8x128xf32, #tpu.memory_space<vmem>>, vector<8x128xf32>
    tpu.vector_store %arg7[%c0_32, %c0_33], %72 {strides = array<i32>} : memref<8x128xf32, #tpu.memory_space<vmem>>, vector<8x128xf32>,
    %c0_34 = arith.constant 0 : index
    %c0_35 = arith.constant 0 : index
    %74 = vector.load %arg8[%c0_34, %c0_35] : memref<32x128xf32, #tpu.memory_space<vmem>>, vector<32x128xf32>
    %c0_36 = arith.constant 0 : index
    %c0_37 = arith.constant 0 : index
    %75 = vector.load %arg4[%c0_36, %c0_37] : memref<128x128xf32, #tpu.memory_space<vmem>>, vector<128x128xf32>
    %cst_38 = arith.constant dense<0.000000e+00> : vector<32x128xf32>
    %76 = tpu.matmul %74, %75, %cst_38 {dimension_numbers = #tpu.dot_dimension_numbers<[1], [0], [0], [1], [0, 0, 1, 1], [], []>} : vector<32x128xf32>, vector<128x128xf32>, vector<32x128xf32> -> vector<32x128xf32>
    %c0_39 = arith.constant 0 : index
    %c0_40 = arith.constant 0 : index
    %77 = vector.load %arg5[%c0_39, %c0_40] : memref<1x128xf32, #tpu.memory_space<vmem>>, vector<1x128xf32>
    %78 = vector.broadcast %77 : vector<1x128xf32> to vector<32x128xf32>
    %79 = arith.addf %76, %78 : vector<32x128xf32>
    %c0_41 = arith.constant 0 : index
    %c0_42 = arith.constant 0 : index
    %80 = vector.load %arg6[%c0_41, %c0_42] : memref<32x128xf32, #tpu.memory_space<vmem>>, vector<32x128xf32>
    tpu.vector_store %arg6[%c0_41, %c0_42], %79 {strides = array<i32>} : memref<32x128xf32, #tpu.memory_space<vmem>>, vector<32x128xf32>,
    return
  }
  func.func @transform_0(%arg0: i32) -> (i32, i32) {
    %c0_i32 = arith.constant 0 : i32
    %c0_i32_0 = arith.constant 0 : i32
    return %arg0, %c0_i32 : i32, i32
  }
  func.func @transform_1(%arg0: i32) -> (i32, i32) {
    %c0_i32 = arith.constant 0 : i32
    %c0_i32_0 = arith.constant 0 : i32
    %c0_i32_1 = arith.constant 0 : i32
    return %c0_i32, %c0_i32_0 : i32, i32
  }
  func.func @transform_2(%arg0: i32) -> (i32, i32) {
    %c0_i32 = arith.constant 0 : i32
    %c0_i32_0 = arith.constant 0 : i32
    %c0_i32_1 = arith.constant 0 : i32
    return %c0_i32, %c0_i32_0 : i32, i32
  }
  func.func @transform_3(%arg0: i32) -> (i32, i32) {
    %c0_i32 = arith.constant 0 : i32
    %c0_i32_0 = arith.constant 0 : i32
    %c0_i32_1 = arith.constant 0 : i32
    return %c0_i32, %c0_i32_0 : i32, i32
  }
  func.func @transform_4(%arg0: i32) -> (i32, i32) {
    %c0_i32 = arith.constant 0 : i32
    %c0_i32_0 = arith.constant 0 : i32
    %c0_i32_1 = arith.constant 0 : i32
    return %c0_i32, %c0_i32_0 : i32, i32
  }
  func.func @transform_5(%arg0: i32) -> (i32, i32) {
    %c0_i32 = arith.constant 0 : i32
    %c0_i32_0 = arith.constant 0 : i32
    return %arg0, %c0_i32 : i32, i32
  }
}

</mosaic_0001>

<llo_original>
// kernel: tpu_custom_call.1
$region0: #{tpu_custom_call.1}
  #allocation0 [shape = 'u32[]', space=smem, size = 0x4, offset = 0x4, fixed_abs, tag = 'smem constant byte address 0x4 - core index']
  #allocation1 [shape = 'u32[144,128]{1,0:T(1,128)}', space=vmem, size = 0x12000, scoped, tag = 'internal scratch']
  #allocation2 [shape = 'f32[8,128]{1,0:T(8,128)}', space=vmem, size = 0x1000, scoped, tag = 'scratch operand']
  #allocation3 [shape = 'f32[32,128]{1,0:T(8,128)}', space=vmem, size = 0x4000, scoped, tag = 'scratch operand']
  %s0 = inlined_call_operand.hbm [shape: f32[64,128], index: 0, kind: input, shape index: {}]
  %s1 = inlined_call_operand.hbm [shape: f32[128,128], index: 1, kind: input, shape index: {}]
  %s2 = inlined_call_operand.vmem [shape: f32[1,128], index: 2, kind: input, shape index: {}]
  %s3 = inlined_call_operand.hbm [shape: f32[128,128], index: 3, kind: input, shape index: {}]
  %s4 = inlined_call_operand.vmem [shape: f32[1,128], index: 4, kind: input, shape index: {}]
  %s5 = inlined_call_operand.hbm [shape: f32[64,128], index: 5, kind: output, shape index: {}]
  %s6 = sld [smem:[#allocation0]]
  $region69: #{tpu_custom_call.1} parent=0
    _
  %s8 = ssub.s32 1, %s6
  %s9 = scalar_select 0, %s8, %s6
  $region1: #{tpu_custom_call.1} parent=0
    #allocation4 [shape = 'u8[32768]{0}', space=vmem, size = 0x8000, scoped, tag = 'input window, operand 0']
    #allocation5 [shape = 's32[2]{0}', space=sflag, size = 0x8, scoped, tag = 'scoped memory for tpu_custom_call.1']
    #allocation6 [shape = 's32[2]{0}', space=sflag, size = 0x8, scoped, tag = 'scoped memory for tpu_custom_call.1']
    #allocation7 [shape = 'u8[65536]{0}', space=vmem, size = 0x10000, scoped, tag = 'input window, operand 1, single buffered']
    #allocation8 [shape = 's32[1]{0}', space=sflag, size = 0x4, scoped, tag = 'scoped memory for tpu_custom_call.1']
    #allocation9 [shape = 'u8[65536]{0}', space=vmem, size = 0x10000, scoped, tag = 'input window, operand 3, single buffered']
    #allocation10 [shape = 'u8[32768]{0}', space=vmem, size = 0x8000, scoped, tag = 'output window, operand 0']
    %10 = vsyncpa [#allocation5], 0
    %s11 = scalar_lea.sflag [#allocation5], 1
    %12 = vsyncpa %s11, 0
    %13 = vsyncpa [#allocation8], 0
    %14 = vsyncpa [#allocation6], 0
    %s15 = scalar_lea.sflag [#allocation6], 1
    %16 = vsyncpa %s15, 0
    loop: start=0, step=1, limit=4
    $region2: #{tpu_custom_call.1} parent=1 // loop_pre_header
      _
    $region3: #{tpu_custom_call.1} parent=1 // loop_header
      %s18 = sphi 0, %s22
      %p19 = scmp.ge.s32.totalorder %s18, 4
      %s28 = sphi 0, %s30
      %s31 = sphi 0, %s28
      %s32 = sphi 0, %s31
      %s48 = sphi 0, %s32
      %s52 = sphi 0, %s52
      %s54 = sphi 0, %s52
      %s55 = sphi 0, %s54
      %s69 = sphi 0, %s55
      %s73 = sphi 0, %s73
      %s75 = sphi 0, %s73
      %s76 = sphi 0, %s75
      %s90 = sphi 0, %s76
      %s94 = sphi 0, %s94
      %s96 = sphi 0, %s94
      %s97 = sphi 0, %s96
      %s111 = sphi 0, %s97
      %s115 = sphi 0, %s115
      %s117 = sphi 0, %s115
      %s118 = sphi 0, %s117
      %s132 = sphi 0, %s118
      %s138 = sphi 0, %s140
      %s141 = sphi 0, %s138
      %s142 = sphi 0, %s141
      %s158 = sphi 0, %s142
    $region4: #{tpu_custom_call.1} parent=1 // loop_header_branch
      %21 = sbr.rel (%p19) target = $region8
    $region5: #{tpu_custom_call.1} parent=1 // loop_body
      %s23 = ssub.s32 %s18, 1
      %s24 = ssub.s32 %s18, 2
      %s25 = sadd.s32 %s18, 1
      %s26 = ssub.s32 %s18, %s25
      %p27 = scmp.eq.s32.totalorder %s26, 0
      %s29 = sadd.s32 %s28, 1
      %s30 = scalar_select %p27, %s28, %s29
      %p33 = pneg %p27
      %p34 = scmp.eq.s32.totalorder %s18, 1
      %p35 = por %p33, %p34
      %p36 = scmp.ne.s32.totalorder %s28, %s31
      %p37 = scmp.eq.s32.totalorder %s18, 0
      %p38 = por %p36, %p37
      %p39 = scmp.ne.s32.totalorder %s28, %s31
      %p40 = scmp.eq.s32.totalorder %s23, 1
      %p41 = por %p39, %p40
      %p42 = scmp.ne.s32.totalorder %s31, %s32
      %p43 = scmp.eq.s32.totalorder %s23, 0
      %p44 = por %p42, %p43
      %p45 = scmp.ne.s32.totalorder %s31, %s32
      %p46 = scmp.eq.s32.totalorder %s24, 1
      %p47 = por %p45, %p46
      %p49 = scmp.ne.s32.totalorder %s32, %s48
      %p50 = scmp.eq.s32.totalorder %s24, 0
      %p51 = por %p49, %p50
      %s53 = sadd.s32 %s52, 1
      %p56 = scmp.eq.s32.totalorder %s18, 1
      %p57 = scmp.ne.s32.totalorder %s52, %s54
      %p58 = scmp.eq.s32.totalorder %s18, 0
      %p59 = por %p57, %p58
      %p60 = scmp.ne.s32.totalorder %s52, %s54
      %p61 = scmp.eq.s32.totalorder %s23, 1
      %p62 = por %p60, %p61
      %p63 = scmp.ne.s32.totalorder %s54, %s55
      %p64 = scmp.eq.s32.totalorder %s23, 0
      %p65 = por %p63, %p64
      %p66 = scmp.ne.s32.totalorder %s54, %s55
      %p67 = scmp.eq.s32.totalorder %s24, 1
      %p68 = por %p66, %p67
      %p70 = scmp.ne.s32.totalorder %s55, %s69
      %p71 = scmp.eq.s32.totalorder %s24, 0
      %p72 = por %p70, %p71
      %s74 = sadd.s32 %s73, 1
      %p77 = scmp.eq.s32.totalorder %s18, 1
      %p78 = scmp.ne.s32.totalorder %s73, %s75
      %p79 = scmp.eq.s32.totalorder %s18, 0
      %p80 = por %p78, %p79
      %p81 = scmp.ne.s32.totalorder %s73, %s75
      %p82 = scmp.eq.s32.totalorder %s23, 1
      %p83 = por %p81, %p82
      %p84 = scmp.ne.s32.totalorder %s75, %s76
      %p85 = scmp.eq.s32.totalorder %s23, 0
      %p86 = por %p84, %p85
      %p87 = scmp.ne.s32.totalorder %s75, %s76
      %p88 = scmp.eq.s32.totalorder %s24, 1
      %p89 = por %p87, %p88
      %p91 = scmp.ne.s32.totalorder %s76, %s90
      %p92 = scmp.eq.s32.totalorder %s24, 0
      %p93 = por %p91, %p92
      %s95 = sadd.s32 %s94, 1
      %p98 = scmp.eq.s32.totalorder %s18, 1
      %p99 = scmp.ne.s32.totalorder %s94, %s96
      %p100 = scmp.eq.s32.totalorder %s18, 0
      %p101 = por %p99, %p100
      %p102 = scmp.ne.s32.totalorder %s94, %s96
      %p103 = scmp.eq.s32.totalorder %s23, 1
      %p104 = por %p102, %p103
      %p105 = scmp.ne.s32.totalorder %s96, %s97
      %p106 = scmp.eq.s32.totalorder %s23, 0
      %p107 = por %p105, %p106
      %p108 = scmp.ne.s32.totalorder %s96, %s97
      %p109 = scmp.eq.s32.totalorder %s24, 1
      %p110 = por %p108, %p109
      %p112 = scmp.ne.s32.totalorder %s97, %s111
      %p113 = scmp.eq.s32.totalorder %s24, 0
      %p114 = por %p112, %p113
      %s116 = sadd.s32 %s115, 1
      %p119 = scmp.eq.s32.totalorder %s18, 1
      %p120 = scmp.ne.s32.totalorder %s115, %s117
      %p121 = scmp.eq.s32.totalorder %s18, 0
      %p122 = por %p120, %p121
      %p123 = scmp.ne.s32.totalorder %s115, %s117
      %p124 = scmp.eq.s32.totalorder %s23, 1
      %p125 = por %p123, %p124
      %p126 = scmp.ne.s32.totalorder %s117, %s118
      %p127 = scmp.eq.s32.totalorder %s23, 0
      %p128 = por %p126, %p127
      %p129 = scmp.ne.s32.totalorder %s117, %s118
      %p130 = scmp.eq.s32.totalorder %s24, 1
      %p131 = por %p129, %p130
      %p133 = scmp.ne.s32.totalorder %s118, %s132
      %p134 = scmp.eq.s32.totalorder %s24, 0
      %p135 = por %p133, %p134
      %s136 = ssub.s32 %s18, %s25
      %p137 = scmp.eq.s32.totalorder %s136, 0
      %s139 = sadd.s32 %s138, 1
      %s140 = scalar_select %p137, %s138, %s139
      %p143 = pneg %p137
      %p144 = scmp.eq.s32.totalorder %s18, 1
      %p145 = por %p143, %p144
      %p146 = scmp.ne.s32.totalorder %s138, %s141
      %p147 = scmp.eq.s32.totalorder %s18, 0
      %p148 = por %p146, %p147
      %p149 = scmp.ne.s32.totalorder %s138, %s141
      %p150 = scmp.eq.s32.totalorder %s23, 1
      %p151 = por %p149, %p150
      %p152 = scmp.ne.s32.totalorder %s141, %s142
      %p153 = scmp.eq.s32.totalorder %s23, 0
      %p154 = por %p152, %p153
      %p155 = scmp.ne.s32.totalorder %s141, %s142
      %p156 = scmp.eq.s32.totalorder %s24, 1
      %p157 = por %p155, %p156
      %p159 = scmp.ne.s32.totalorder %s142, %s158
      %p160 = scmp.eq.s32.totalorder %s24, 0
      %p161 = por %p159, %p160
      %p162 = scmp.le.s32.totalorder 1, %s18
      %p163 = scmp.lt.s32.totalorder %s18, 3
      %p164 = pnand %p162, %p163
      %p165 = pneg %p164
      // Predicated region
      $region9: #{tpu_custom_call.1} parent=5 // pred_check
        _
      $region10: #{tpu_custom_call.1} parent=5 // pred_check_branch
        %167 = sbr.rel (%p164) target = $region12
      $region11: #{tpu_custom_call.1} parent=5 // pred_region
        %s168 = ssub.s32 %s18, 1
        // Predicated region
        $region13: #{tpu_custom_call.1} parent=11 // pred_check
          %p169 = pneg %p65
        $region14: #{tpu_custom_call.1} parent=11 // pred_check_branch
          %171 = sbr.rel (%p169) target = $region16
        $region15: #{tpu_custom_call.1} parent=11 // pred_region
          %s173 = ssub.s32 2048, 2048
          %174 = vsyncadd [#allocation8], %s173
          %s175 = sshll.u32 [#allocation7], 4
          %s176 = int_to_ptr.vmem [resolvable:$true] %s175
          %181 = dma.hbm_to_vmem [thread:$0]  %s1, 2048, %s176, [#allocation8], 128, 128, 8
        $region16: #{tpu_custom_call.1} parent=11 // pred_fallthru
          _
        // Predicated region
        $region17: #{tpu_custom_call.1} parent=11 // pred_check
          %p182 = pneg %p86
        $region18: #{tpu_custom_call.1} parent=11 // pred_check_branch
          %184 = sbr.rel (%p182) target = $region20
        $region19: #{tpu_custom_call.1} parent=11 // pred_region
          _
        $region20: #{tpu_custom_call.1} parent=11 // pred_fallthru
          _
        // Predicated region
        $region21: #{tpu_custom_call.1} parent=11 // pred_check
          %p185 = pneg %p107
        $region22: #{tpu_custom_call.1} parent=11 // pred_check_branch
          %187 = sbr.rel (%p185) target = $region24
        $region23: #{tpu_custom_call.1} parent=11 // pred_region
          %s189 = ssub.s32 2048, 2048
          %190 = vsyncadd [#allocation8], %s189
          %s191 = sshll.u32 [#allocation9], 4
          %s192 = int_to_ptr.vmem [resolvable:$true] %s191
          %197 = dma.hbm_to_vmem [thread:$0]  %s3, 2048, %s192, [#allocation8], 128, 128, 8
        $region24: #{tpu_custom_call.1} parent=11 // pred_fallthru
          _
        // Predicated region
        $region25: #{tpu_custom_call.1} parent=11 // pred_check
          %p198 = pneg %p128
        $region26: #{tpu_custom_call.1} parent=11 // pred_check_branch
          %200 = sbr.rel (%p198) target = $region28
        $region27: #{tpu_custom_call.1} parent=11 // pred_region
          _
        $region28: #{tpu_custom_call.1} parent=11 // pred_fallthru
          _
      $region12: #{tpu_custom_call.1} parent=5 // pred_fallthru
        _
      %p201 = scmp.lt.s32.totalorder %s18, 2
      // Predicated region
      $region29: #{tpu_custom_call.1} parent=5 // pred_check
        %p202 = pneg %p201
      $region30: #{tpu_custom_call.1} parent=5 // pred_check_branch
        %204 = sbr.rel (%p202) target = $region32
      $region31: #{tpu_custom_call.1} parent=5 // pred_region
        // Predicated region
        $region33: #{tpu_custom_call.1} parent=31 // pred_check
          %p205 = pneg %p38
        $region34: #{tpu_custom_call.1} parent=31 // pred_check_branch
          %207 = sbr.rel (%p205) target = $region36
        $region35: #{tpu_custom_call.1} parent=31 // pred_region
          %s208 = sand.u32 %s28, 1
          %s209 = scalar_lea.sflag [#allocation5], %s208
          %s210 = sand.u32 %s28, 1
          %s211 = smul.addr %s210, 32
          %s212 = scalar_lea.vmem [#allocation4], %s211
          %s213 = smul.u32 4, %s18
          %s215 = ssub.s32 512, 512
          %216 = vsyncadd %s209, %s215
          %s217 = smul.addr %s213, 128
          %s218 = scalar_lea.hbm %s0, %s217
          %s219 = sshll.u32 %s212, 4
          %s220 = int_to_ptr.vmem [resolvable:$true] %s219
          %225 = dma.hbm_to_vmem [thread:$0]  %s218, 512, %s220, %s209, 128, 128, 8
        $region36: #{tpu_custom_call.1} parent=31 // pred_fallthru
          _
      $region32: #{tpu_custom_call.1} parent=5 // pred_fallthru
        _
      %p226 = scmp.le.s32.totalorder 1, %s18
      %p227 = scmp.lt.s32.totalorder %s18, 3
      %p228 = pnand %p226, %p227
      %p229 = pneg %p228
      // Predicated region
      $region37: #{tpu_custom_call.1} parent=5 // pred_check
        _
      $region38: #{tpu_custom_call.1} parent=5 // pred_check_branch
        %231 = sbr.rel (%p228) target = $region40
      $region39: #{tpu_custom_call.1} parent=5 // pred_region
        %s232 = ssub.s32 %s18, 1
        %s233 = sand.u32 %s31, 1
        %s234 = scalar_lea.sflag [#allocation5], %s233
        %s235 = sand.u32 %s31, 1
        %s236 = smul.addr %s235, 32
        %s237 = scalar_lea.vmem [#allocation4], %s236
        // Predicated region
        $region41: #{tpu_custom_call.1} parent=39 // pred_check
          %p238 = pneg %p44
        $region42: #{tpu_custom_call.1} parent=39 // pred_check_branch
          %240 = sbr.rel (%p238) target = $region44
        $region43: #{tpu_custom_call.1} parent=39 // pred_region
          %241 = dma.done %s234, 512
        $region44: #{tpu_custom_call.1} parent=39 // pred_fallthru
          _
        // Predicated region
        $region45: #{tpu_custom_call.1} parent=39 // pred_check
          %p242 = pneg %p65
        $region46: #{tpu_custom_call.1} parent=39 // pred_check_branch
          %244 = sbr.rel (%p242) target = $region48
        $region47: #{tpu_custom_call.1} parent=39 // pred_region
          %245 = dma.done [#allocation8], 2048
        $region48: #{tpu_custom_call.1} parent=39 // pred_fallthru
          _
        // Predicated region
        $region49: #{tpu_custom_call.1} parent=39 // pred_check
          %p246 = pneg %p107
        $region50: #{tpu_custom_call.1} parent=39 // pred_check_branch
          %248 = sbr.rel (%p246) target = $region52
        $region51: #{tpu_custom_call.1} parent=39 // pred_region
          %249 = dma.done [#allocation8], 2048
        $region52: #{tpu_custom_call.1} parent=39 // pred_fallthru
          _
        %s250 = sand.u32 %s31, 1
        %s251 = scalar_lea.sflag [#allocation5], %s250
        %s252 = sand.u32 %s31, 1
        %s253 = smul.addr %s252, 32
        %s254 = scalar_lea.vmem [#allocation4], %s253
        %p255 = pneg %p44
        %p256 = pneg %p41
        %p257 = pneg %p65
        %p258 = pneg %p62
        %p259 = pneg %p86
        %p260 = pneg %p83
        %p261 = pneg %p107
        %p262 = pneg %p104
        %p263 = pneg %p128
        %p264 = pneg %p125
        %p265 = pneg %p154
        %p266 = pneg %p151
        %s267 = sand.u32 %s141, 1
        %s268 = scalar_lea.sflag [#allocation6], %s267
        %s269 = sand.u32 %s141, 1
        %s270 = smul.addr %s269, 32
        %s271 = scalar_lea.vmem [#allocation10], %s270
        %s272 = smul.u32 4, %s23
        %s273 = smul.u32 4, %s23
        %p274 = scmp.eq.s32.totalorder %s23, 0
        // Predicated region
        $region53: #{tpu_custom_call.1} parent=39 // pred_check
          %p275 = pneg %p274
        $region54: #{tpu_custom_call.1} parent=39 // pred_check_branch
          %277 = sbr.rel (%p275) target = $region56
        $region55: #{tpu_custom_call.1} parent=39 // pred_region
          %278 = vst [vmem:[#allocation2] sm:$0xff] 0.0
        $region56: #{tpu_custom_call.1} parent=39 // pred_fallthru
          _
        %v279 = vld [vmem:[%s237] sm:$0xff]
        %v280 = vld [vmem:[%s237 + $0x8] sm:$0xff]
        %v281 = vld [vmem:[%s237 + $0x10] sm:$0xff]
        %v282 = vld [vmem:[%s237 + $0x18] sm:$0xff]
        %v283 = vld [vmem:[#allocation7] sm:$0xff]
        %v284 = vld [vmem:[#allocation7 + $0x8] sm:$0xff]
        %v285 = vld [vmem:[#allocation7 + $0x10] sm:$0xff]
        %v286 = vld [vmem:[#allocation7 + $0x18] sm:$0xff]
        %v287 = vld [vmem:[#allocation7 + $0x20] sm:$0xff]
        %v288 = vld [vmem:[#allocation7 + $0x28] sm:$0xff]
        %v289 = vld [vmem:[#allocation7 + $0x30] sm:$0xff]
        %v290 = vld [vmem:[#allocation7 + $0x38] sm:$0xff]
        %v291 = vld [vmem:[#allocation7 + $0x40] sm:$0xff]
        %v292 = vld [vmem:[#allocation7 + $0x48] sm:$0xff]
        %v293 = vld [vmem:[#allocation7 + $0x50] sm:$0xff]
        %v294 = vld [vmem:[#allocation7 + $0x58] sm:$0xff]
        %v295 = vld [vmem:[#allocation7 + $0x60] sm:$0xff]
        %v296 = vld [vmem:[#allocation7 + $0x68] sm:$0xff]
        %v297 = vld [vmem:[#allocation7 + $0x70] sm:$0xff]
        %v298 = vld [vmem:[#allocation7 + $0x78] sm:$0xff]
        %v299 = vld [vmem:[%s2] sm:$0x1]
        %v301 = vlaneseq
        %v302 = vshrl.u32 %v301, 7
        %v303 = vsub.s32 0, %v302
        %v304 = vrot.slane %v299, %v303
        %306 = vmatprep.subr.mxu0 0.0
        %307 = vmatpush1.msra.mxu0 %v298
        %308 = vmatprep.subr.mxu0 0.0
        %309 = vmatpush1.msra.mxu0 %v297
        %310 = vmatprep.subr.mxu0 0.0
        %311 = vmatpush1.msra.mxu0 %v296
        %312 = vmatprep.subr.mxu0 0.0
        %313 = vmatpush1.msra.mxu0 %v295
        %314 = vmatprep.subr.mxu0 0.0
        %315 = vmatpush1.msra.mxu0 %v294
        %316 = vmatprep.subr.mxu0 0.0
        %317 = vmatpush1.msra.mxu0 %v293
        %318 = vmatprep.subr.mxu0 0.0
        %319 = vmatpush1.msra.mxu0 %v292
        %320 = vmatprep.subr.mxu0 0.0
        %321 = vmatpush1.msra.mxu0 %v291
        %322 = vmatprep.subr.mxu0 0.0
        %323 = vmatpush1.msra.mxu0 %v290
        %324 = vmatprep.subr.mxu0 0.0
        %325 = vmatpush1.msra.mxu0 %v289
        %326 = vmatprep.subr.mxu0 0.0
        %327 = vmatpush1.msra.mxu0 %v288
        %328 = vmatprep.subr.mxu0 0.0
        %329 = vmatpush1.msra.mxu0 %v287
        %330 = vmatprep.subr.mxu0 0.0
        %331 = vmatpush1.msra.mxu0 %v286
        %332 = vmatprep.subr.mxu0 0.0
        %333 = vmatpush1.msra.mxu0 %v285
        %334 = vmatprep.subr.mxu0 0.0
        %335 = vmatpush1.msra.mxu0 %v284
        %336 = vmatprep.subr.mxu0 0.0
        %337 = vmatpush1.msra.mxu0 %v283
        %338 = vmatprep.subr.mxu0 0.0
        %339 = vmatpush2.msra.mxu0 0.0
        %340 = vmatprep.subr.mxu0 0.0
        %341 = vmatpush2.msra.mxu0 0.0
        %342 = vmatprep.subr.mxu0 0.0
        %343 = vmatpush2.msra.mxu0 0.0
        %344 = vmatprep.subr.mxu0 0.0
        %345 = vmatpush2.msra.mxu0 0.0
        %346 = vmatprep.subr.mxu0 0.0
        %347 = vmatpush2.msra.mxu0 0.0
        %348 = vmatprep.subr.mxu0 0.0
        %349 = vmatpush2.msra.mxu0 0.0
        %350 = vmatprep.subr.mxu0 0.0
        %351 = vmatpush2.msra.mxu0 0.0
        %352 = vmatprep.subr.mxu0 0.0
        %353 = vmatpush2.msra.mxu0 0.0
        %354 = vmatprep.subr.mxu0 0.0
        %355 = vmatpush2.msra.mxu0 0.0
        %356 = vmatprep.subr.mxu0 0.0
        %357 = vmatpush2.msra.mxu0 0.0
        %358 = vmatprep.subr.mxu0 0.0
        %359 = vmatpush2.msra.mxu0 0.0
        %360 = vmatprep.subr.mxu0 0.0
        %361 = vmatpush2.msra.mxu0 0.0
        %362 = vmatprep.subr.mxu0 0.0
        %363 = vmatpush2.msra.mxu0 0.0
        %364 = vmatprep.subr.mxu0 0.0
        %365 = vmatpush2.msra.mxu0 0.0
        %366 = vmatprep.subr.mxu0 0.0
        %367 = vmatpush2.msra.mxu0 0.0
        %368 = vmatprep.subr.mxu0 0.0
        %369 = vmatpush2.msra.mxu0 0.0
        %370 = vmatprep.mubr.f32.mxu0 0.0
        %371 = vmatmul.mubr.f32.gmra.mxu0 %v279
        %v372 = vpop.f32.mrf.mxu0
        %v373 = vadd.f32 %v304, %v372
        %v374 = vpop.f32.mrf.mxu0
        %375 = vmatprep.mubr.f32.mxu0 0.0
        %376 = vmatmul.mubr.f32.gmra.mxu0 %v280
        %v377 = vpop.f32.mrf.mxu0
        %v378 = vadd.f32 %v304, %v377
        %v379 = vpop.f32.mrf.mxu0
        %380 = vmatprep.mubr.f32.mxu0 0.0
        %381 = vmatmul.mubr.f32.gmra.mxu0 %v281
        %v382 = vpop.f32.mrf.mxu0
        %v383 = vadd.f32 %v304, %v382
        %v384 = vpop.f32.mrf.mxu0
        %385 = vmatprep.mubr.f32.mxu0 0.0
        %386 = vmatmul.mubr.f32.gmra.mxu0 %v282
        %v387 = vpop.f32.mrf.mxu0
        %v388 = vadd.f32 %v304, %v387
        %v389 = vpop.f32.mrf.mxu0
        %390 = vdwg.mxu0
        %v391 = vmul.f32 %v373, 0.5
        %v392 = vmul.f32 %v378, 0.5
        %v393 = vmul.f32 %v383, 0.5
        %v394 = vmul.f32 %v388, 0.5
        %395 = vst [vmem:[#allocation3] sm:$0xff] %v391
        %396 = vst [vmem:[#allocation3 + $0x8] sm:$0xff] %v392
        %397 = vst [vmem:[#allocation3 + $0x10] sm:$0xff] %v393
        %398 = vst [vmem:[#allocation3 + $0x18] sm:$0xff] %v394
        %v399 = vld [vmem:[#allocation2] sm:$0xff]
        %v400 = vld [vmem:[#allocation3] sm:$0xff]
        %v401 = vmul.f32 %v399, 0.5
        %v402 = vadd.f32 %v401, %v400
        %vm403 = vcmp.ge.f32.partialorder %v402, 0.5
        %v404 = vsel %vm403, 1, 0
        %v405 = vcvt.s32.f32 %v404
        %406 = vst [vmem:[#allocation3] sm:$0xff] %v405
        %v407 = vsel %vm403, 0.0, %v402
        %s408 = scalar_lea.vmem [#allocation3], 8
        %v409 = vld [vmem:[%s408] sm:$0xff]
        %v410 = vmul.f32 %v407, 0.5
        %v411 = vadd.f32 %v410, %v409
        %vm412 = vcmp.ge.f32.partialorder %v411, 0.5
        %v413 = vsel %vm412, 1, 0
        %v414 = vcvt.s32.f32 %v413
        %415 = vst [vmem:[%s408] sm:$0xff] %v414
        %v416 = vsel %vm412, 0.0, %v411
        %s417 = scalar_lea.vmem [#allocation3], 16
        %v418 = vld [vmem:[%s417] sm:$0xff]
        %v419 = vmul.f32 %v416, 0.5
        %v420 = vadd.f32 %v419, %v418
        %vm421 = vcmp.ge.f32.partialorder %v420, 0.5
        %v422 = vsel %vm421, 1, 0
        %v423 = vcvt.s32.f32 %v422
        %424 = vst [vmem:[%s417] sm:$0xff] %v423
        %v425 = vsel %vm421, 0.0, %v420
        %s426 = scalar_lea.vmem [#allocation3], 24
        %v427 = vld [vmem:[%s426] sm:$0xff]
        %v428 = vmul.f32 %v425, 0.5
        %v429 = vadd.f32 %v428, %v427
        %vm430 = vcmp.ge.f32.partialorder %v429, 0.5
        %v431 = vsel %vm430, 1, 0
        %v432 = vcvt.s32.f32 %v431
        %433 = vst [vmem:[%s426] sm:$0xff] %v432
        %v434 = vsel %vm430, 0.0, %v429
        %435 = vst [vmem:[#allocation2] sm:$0xff] %v434
        %v436 = vld [vmem:[#allocation3] sm:$0xff]
        %v437 = vld [vmem:[#allocation3 + $0x8] sm:$0xff]
        %v438 = vld [vmem:[#allocation3 + $0x10] sm:$0xff]
        %v439 = vld [vmem:[#allocation3 + $0x18] sm:$0xff]
        %v440 = vld [vmem:[#allocation9] sm:$0xff]
        %v441 = vld [vmem:[#allocation9 + $0x8] sm:$0xff]
        %v442 = vld [vmem:[#allocation9 + $0x10] sm:$0xff]
        %v443 = vld [vmem:[#allocation9 + $0x18] sm:$0xff]
        %v444 = vld [vmem:[#allocation9 + $0x20] sm:$0xff]
        %v445 = vld [vmem:[#allocation9 + $0x28] sm:$0xff]
        %v446 = vld [vmem:[#allocation9 + $0x30] sm:$0xff]
        %v447 = vld [vmem:[#allocation9 + $0x38] sm:$0xff]
        %v448 = vld [vmem:[#allocation9 + $0x40] sm:$0xff]
        %v449 = vld [vmem:[#allocation9 + $0x48] sm:$0xff]
        %v450 = vld [vmem:[#allocation9 + $0x50] sm:$0xff]
        %v451 = vld [vmem:[#allocation9 + $0x58] sm:$0xff]
        %v452 = vld [vmem:[#allocation9 + $0x60] sm:$0xff]
        %v453 = vld [vmem:[#allocation9 + $0x68] sm:$0xff]
        %v454 = vld [vmem:[#allocation9 + $0x70] sm:$0xff]
        %v455 = vld [vmem:[#allocation9 + $0x78] sm:$0xff]
        %v456 = vld [vmem:[%s4] sm:$0x1]
        %v458 = vlaneseq
        %v459 = vshrl.u32 %v458, 7
        %v460 = vsub.s32 0, %v459
        %v461 = vrot.slane %v456, %v460
        %463 = vmatprep.subr.mxu0 0.0
        %464 = vmatpush1.msra.mxu0 %v455
        %465 = vmatprep.subr.mxu0 0.0
        %466 = vmatpush1.msra.mxu0 %v454
        %467 = vmatprep.subr.mxu0 0.0
        %468 = vmatpush1.msra.mxu0 %v453
        %469 = vmatprep.subr.mxu0 0.0
        %470 = vmatpush1.msra.mxu0 %v452
        %471 = vmatprep.subr.mxu0 0.0
        %472 = vmatpush1.msra.mxu0 %v451
        %473 = vmatprep.subr.mxu0 0.0
        %474 = vmatpush1.msra.mxu0 %v450
        %475 = vmatprep.subr.mxu0 0.0
        %476 = vmatpush1.msra.mxu0 %v449
        %477 = vmatprep.subr.mxu0 0.0
        %478 = vmatpush1.msra.mxu0 %v448
        %479 = vmatprep.subr.mxu0 0.0
        %480 = vmatpush1.msra.mxu0 %v447
        %481 = vmatprep.subr.mxu0 0.0
        %482 = vmatpush1.msra.mxu0 %v446
        %483 = vmatprep.subr.mxu0 0.0
        %484 = vmatpush1.msra.mxu0 %v445
        %485 = vmatprep.subr.mxu0 0.0
        %486 = vmatpush1.msra.mxu0 %v444
        %487 = vmatprep.subr.mxu0 0.0
        %488 = vmatpush1.msra.mxu0 %v443
        %489 = vmatprep.subr.mxu0 0.0
        %490 = vmatpush1.msra.mxu0 %v442
        %491 = vmatprep.subr.mxu0 0.0
        %492 = vmatpush1.msra.mxu0 %v441
        %493 = vmatprep.subr.mxu0 0.0
        %494 = vmatpush1.msra.mxu0 %v440
        %495 = vmatprep.subr.mxu0 0.0
        %496 = vmatpush2.msra.mxu0 0.0
        %497 = vmatprep.subr.mxu0 0.0
        %498 = vmatpush2.msra.mxu0 0.0
        %499 = vmatprep.subr.mxu0 0.0
        %500 = vmatpush2.msra.mxu0 0.0
        %501 = vmatprep.subr.mxu0 0.0
        %502 = vmatpush2.msra.mxu0 0.0
        %503 = vmatprep.subr.mxu0 0.0
        %504 = vmatpush2.msra.mxu0 0.0
        %505 = vmatprep.subr.mxu0 0.0
        %506 = vmatpush2.msra.mxu0 0.0
        %507 = vmatprep.subr.mxu0 0.0
        %508 = vmatpush2.msra.mxu0 0.0
        %509 = vmatprep.subr.mxu0 0.0
        %510 = vmatpush2.msra.mxu0 0.0
        %511 = vmatprep.subr.mxu0 0.0
        %512 = vmatpush2.msra.mxu0 0.0
        %513 = vmatprep.subr.mxu0 0.0
        %514 = vmatpush2.msra.mxu0 0.0
        %515 = vmatprep.subr.mxu0 0.0
        %516 = vmatpush2.msra.mxu0 0.0
        %517 = vmatprep.subr.mxu0 0.0
        %518 = vmatpush2.msra.mxu0 0.0
        %519 = vmatprep.subr.mxu0 0.0
        %520 = vmatpush2.msra.mxu0 0.0
        %521 = vmatprep.subr.mxu0 0.0
        %522 = vmatpush2.msra.mxu0 0.0
        %523 = vmatprep.subr.mxu0 0.0
        %524 = vmatpush2.msra.mxu0 0.0
        %525 = vmatprep.subr.mxu0 0.0
        %526 = vmatpush2.msra.mxu0 0.0
        %527 = vmatprep.mubr.f32.mxu0 0.0
        %528 = vmatmul.mubr.f32.gmra.mxu0 %v436
        %v529 = vpop.f32.mrf.mxu0
        %v530 = vadd.f32 %v461, %v529
        %v531 = vpop.f32.mrf.mxu0
        %532 = vmatprep.mubr.f32.mxu0 0.0
        %533 = vmatmul.mubr.f32.gmra.mxu0 %v437
        %v534 = vpop.f32.mrf.mxu0
        %v535 = vadd.f32 %v461, %v534
        %v536 = vpop.f32.mrf.mxu0
        %537 = vmatprep.mubr.f32.mxu0 0.0
        %538 = vmatmul.mubr.f32.gmra.mxu0 %v438
        %v539 = vpop.f32.mrf.mxu0
        %v540 = vadd.f32 %v461, %v539
        %v541 = vpop.f32.mrf.mxu0
        %542 = vmatprep.mubr.f32.mxu0 0.0
        %543 = vmatmul.mubr.f32.gmra.mxu0 %v439
        %v544 = vpop.f32.mrf.mxu0
        %v545 = vadd.f32 %v461, %v544
        %v546 = vpop.f32.mrf.mxu0
        %547 = vdwg.mxu0
        %548 = vst [vmem:[%s271] sm:$0xff] %v530
        %549 = vst [vmem:[%s271 + $0x8] sm:$0xff] %v535
        %550 = vst [vmem:[%s271 + $0x10] sm:$0xff] %v540
        %551 = vst [vmem:[%s271 + $0x18] sm:$0xff] %v545
        %s552 = sand.u32 %s141, 1
        %s553 = scalar_lea.sflag [#allocation6], %s552
        %s554 = sand.u32 %s141, 1
        %s555 = smul.addr %s554, 32
        %s556 = scalar_lea.vmem [#allocation10], %s555
        // Predicated region
        $region57: #{tpu_custom_call.1} parent=39 // pred_check
          %p557 = pneg %p151
        $region58: #{tpu_custom_call.1} parent=39 // pred_check_branch
          %559 = sbr.rel (%p557) target = $region60
        $region59: #{tpu_custom_call.1} parent=39 // pred_region
          %s560 = smul.u32 4, %s23
          %s562 = ssub.s32 512, 512
          %563 = vsyncadd %s553, %s562
          %s564 = smul.addr %s560, 128
          %s565 = scalar_lea.hbm %s5, %s564
          %s566 = sshll.u32 %s556, 4
          %s567 = int_to_ptr.vmem [resolvable:$true] %s566
          %572 = dma.vmem_to_hbm [thread:$0]  %s567, 512, %s565, %s553, 128, 128, 8
        $region60: #{tpu_custom_call.1} parent=39 // pred_fallthru
          _
      $region40: #{tpu_custom_call.1} parent=5 // pred_fallthru
        _
      %p573 = scmp.le.s32.totalorder 2, %s18
      // Predicated region
      $region61: #{tpu_custom_call.1} parent=5 // pred_check
        %p574 = pneg %p573
      $region62: #{tpu_custom_call.1} parent=5 // pred_check_branch
        %576 = sbr.rel (%p574) target = $region64
      $region63: #{tpu_custom_call.1} parent=5 // pred_region
        %s577 = ssub.s32 %s18, 2
        // Predicated region
        $region65: #{tpu_custom_call.1} parent=63 // pred_check
          %p578 = pneg %p157
        $region66: #{tpu_custom_call.1} parent=63 // pred_check_branch
          %580 = sbr.rel (%p578) target = $region68
        $region67: #{tpu_custom_call.1} parent=63 // pred_region
          %s581 = sand.u32 %s142, 1
          %s582 = scalar_lea.sflag [#allocation6], %s581
          %s583 = sand.u32 %s142, 1
          %s584 = smul.addr %s583, 32
          %s585 = scalar_lea.vmem [#allocation10], %s584
          %586 = dma.done %s582, 512
        $region68: #{tpu_custom_call.1} parent=63 // pred_fallthru
          _
      $region64: #{tpu_custom_call.1} parent=5 // pred_fallthru
        _
    $region6: #{tpu_custom_call.1} parent=1 // loop_footer
      %s22 = sadd.s32 1, %s18
    $region7: #{tpu_custom_call.1} parent=1 // loop_footer_branch
      %17 = sbr.rel target = $region3
    $region8: #{tpu_custom_call.1} parent=1 // loop_exit
      _
    %587 = vsyncpa [#allocation5], 1
    %s588 = scalar_lea.sflag [#allocation5], 1
    %589 = vsyncpa %s588, 1
    %590 = vsyncpa [#allocation8], 1
    %591 = vsyncpa [#allocation6], 1
    %s592 = scalar_lea.sflag [#allocation6], 1
    %593 = vsyncpa %s592, 1

</llo_original>
